<compile_context>
chip_gen: v7x
topology: tpu7x:2x2x1
jax: 0.10.0
libtpu: 0.0.40
codegen_flags: <defaults>
</compile_context>

<pallas_src>
import functools

import jax
import jax.numpy as jnp
import numpy as np
from jax import lax
from jax.experimental import pallas as pl
from jax.experimental.pallas import tpu as pltpu

BN_EPS = 1e-5


def _round_up(x, m):
    return (x + m - 1) // m * m


def _largest_divisor_leq(x, cap):
    cap = max(1, min(x, cap))
    for c in range(cap, 0, -1):
        if x % c == 0:
            return c
    return 1


def _vmem_limit_bytes():
    """Generation-aware VMEM budget (v7x: 64 MiB/TC; v5e/v6e: 128 MiB)."""
    try:
        cap = int(pltpu.get_tpu_info().vmem_capacity_bytes)
    except Exception:  # pragma: no cover - conservative fallback
        cap = 64 << 20
    if cap <= (64 << 20):
        return 44 << 20            # v7x-class: leave headroom in 64 MiB
    return 100 << 20               # v5e / v6e: 128 MiB physical


def _conv_stats_kernel(x_ref, w_ref, mask_ref, conv_ref, stats_ref,
                       acc_ref, stk_ref, *, shifts, cin_blk, lw, inv_cnt):
    """Dilated conv (folded deep matmul) + centered BN partial statistics.

    x_ref:     (1, Cin_blk, Lp)            bf16  padded image, flat spatial on lanes
    w_ref:     (1, Cout_blk, K*K*Cin_blk)  bf16  packed conv weights for this tile
    mask_ref:  (1, LW)                     f32   1.0 on valid output pixels
    conv_ref:  (1, Cout_blk, LW)           bf16  wide conv output (written at last j)
    stats_ref: (1, Cout_blk, 2)            f32   per-image [sum, centered M2]
    acc_ref:   (Cout_blk, LW)              f32   VMEM accumulator (cin reduction)
    stk_ref:   (K*K*Cin_blk, LW)           bf16  stacked shifted operand scratch
    """
    j = pl.program_id(2)

    @pl.when(j == 0)
    def _():
        acc_ref[...] = jnp.zeros_like(acc_ref)

    # Build the stacked operand ONCE per step (static unaligned lane slices ->
    # one relayout copy per tap), then a single deep MXU matmul so the
    # accumulation over Cin_blk*K*K happens inside the MXU pipeline.
    for t, shift in enumerate(shifts):
        stk_ref[t * cin_blk:(t + 1) * cin_blk, :] = x_ref[0, :, shift:shift + lw]

    acc_ref[...] += jnp.dot(w_ref[0], stk_ref[...],
                            preferred_element_type=jnp.float32)

    @pl.when(j == pl.num_programs(2) - 1)
    def _():
        acc = acc_ref[...]
        conv_ref[0] = acc.astype(conv_ref.dtype)        # bf16 intermediate

        # Centered (Welford-style) per-image partials over valid lanes only;
        # avoids E[x^2] - mean^2 cancellation for non-zero-mean conv outputs.
        m = mask_ref[...]                                # (1, LW)
        s = jnp.sum(acc * m, axis=1, keepdims=True)      # (Cout_blk, 1)
        mu = s * inv_cnt
        d0 = (acc - mu) * m
        m2 = jnp.sum(d0 * d0, axis=1, keepdims=True)     # (Cout_blk, 1)
        # Per-image stats kept as (tiny) HBM outputs so the image / cout grid
        # axes stay "parallel" (megacore); glue reduction is negligible.
        stats_ref[0, :, 0:1] = s
        stats_ref[0, :, 1:2] = m2


def _bn_relu_kernel(conv_ref, scale_ref, shift_ref, o_ref, *, w_out):
    """Fused BN affine + ReLU + de-widen; writes NCHW output directly."""
    x = conv_ref[:, :, :, :w_out].astype(jnp.float32)    # drop invalid columns
    o_ref[...] = jnp.maximum(x * scale_ref[...] + shift_ref[...],
                             0.0).astype(o_ref.dtype)


def aspp_forward(x_nchw, weight_oikk, gamma, beta, *, kernel_size, padding,
                 dilation):
    """ASPPModule.forward. x: NCHW f32, weight: (Cout, Cin, K, K)."""
    n, cin, h, w = x_nchw.shape
    cout = weight_oikk.shape[0]
    k, p, d = kernel_size, padding, dilation

    hp, wp = h + 2 * p, w + 2 * p
    h_out = hp - d * (k - 1)
    w_out = wp - d * (k - 1)
    assert h_out > 0 and w_out > 0

    # "Wide" conv layout: one output per padded-width column; only cols < w_out
    # are valid.  LW is kept EXACT so (N, Cout, LW) reshapes for free into
    # (N, Cout, H_out, Wp) for pass 2 (no dead lanes in the bf16 intermediate).
    lw = h_out * wp
    max_shift = (k - 1) * d * wp + (k - 1) * d
    lp = _round_up(lw + max_shift, 128)        # padded flat input length

    vmem_limit = _vmem_limit_bytes()

    # ---- channel tiling (multiples of 8 sublanes, exact divisors) ----------
    cin_pad = _round_up(cin, 8)
    cout_pad = _round_up(cout, 8)

    # Size the Cin block so the stacked (K*K*Cin_blk, LW) bf16 scratch stays
    # within a fraction of the VMEM budget (keeps realistic Cin=2048 ASPP
    # within v7x's 64 MiB).
    stk_budget = vmem_limit // 6
    max_cu = min(64, max(1, stk_budget // (k * k * 8 * lw * 2)))
    cu = cin_pad // 8
    du = _largest_divisor_leq(cu, max_cu)
    cin_blk, n_ct = 8 * du, cu // du

    cv = cout_pad // 8
    dv = _largest_divisor_leq(cv, 16)          # Cout_blk <= 128
    cout_blk, n_co = 8 * dv, cv // dv

    # ---- host-side layout plumbing (no K*K im2col expansion in HBM) --------
    # NCHW -> zero-pad channels to a multiple of 8, spatial pad, flatten
    # (Hp*Wp) onto the lane axis, bf16 for the MXU.
    xp = jnp.pad(x_nchw, ((0, 0), (0, cin_pad - cin), (p, p), (p, p)))
    xf = xp.reshape(n, cin_pad, hp * wp)
    xf = jnp.pad(xf, ((0, 0), (0, 0), (0, lp - hp * wp))).astype(jnp.bfloat16)

    # (Cout, Cin, K, K) -> (n_ct, Cout_pad, K*K*Cin_blk); row order inside the
    # last dim is [tap t = ky*K + kx, channel-within-block] to match stk_ref.
    wpad = jnp.pad(weight_oikk,
                   ((0, cout_pad - cout), (0, cin_pad - cin), (0, 0), (0, 0)))
    wt = jnp.transpose(wpad, (0, 2, 3, 1))                  # (Co, K, K, Ci)
    wt = wt.reshape(cout_pad, k, k, n_ct, cin_blk)
    wt = jnp.transpose(wt, (3, 0, 1, 2, 4))                 # (n_ct, Co, K, K, Cb)
    wt = wt.reshape(n_ct, cout_pad, k * k * cin_blk).astype(jnp.bfloat16)

    # Static per-tap lane shifts in flattened padded coordinates.
    shifts = tuple(ky * d * wp + kx * d for ky in range(k) for kx in range(k))

    # Valid-pixel mask over the wide lane axis (BN statistics only).
    lane = np.arange(lw)
    mask = jnp.asarray(((lane % wp) < w_out).reshape(1, lw).astype(np.float32))

    # ---------------- pass 1: conv + per-image centered BN partials ---------
    kernel1 = functools.partial(_conv_stats_kernel, shifts=shifts,
                                cin_blk=cin_blk, lw=lw,
                                inv_cnt=1.0 / float(h_out * w_out))
    conv_wide, stats = pl.pallas_call(
        kernel1,
        out_shape=(jax.ShapeDtypeStruct((n, cout_pad, lw), jnp.bfloat16),
                   jax.ShapeDtypeStruct((n, cout_pad, 2), jnp.float32)),
        grid=(n, n_co, n_ct),
        in_specs=[
            pl.BlockSpec((1, cin_blk, lp), lambda i, c, j: (i, j, 0)),
            pl.BlockSpec((1, cout_blk, k * k * cin_blk),
                         lambda i, c, j: (j, c, 0)),
            pl.BlockSpec((1, lw), lambda i, c, j: (0, 0)),
        ],
        out_specs=(
            pl.BlockSpec((1, cout_blk, lw), lambda i, c, j: (i, c, 0)),
            pl.BlockSpec((1, cout_blk, 2), lambda i, c, j: (i, c, 0)),
        ),
        scratch_shapes=[pltpu.VMEM((cout_blk, lw), jnp.float32),
                        pltpu.VMEM((k * k * cin_blk, lw), jnp.bfloat16)],
        compiler_params=pltpu.CompilerParams(
            dimension_semantics=("parallel", "parallel", "arbitrary"),
            vmem_limit_bytes=vmem_limit),
    )(xf, wt, mask)

    # ---- tiny f32 glue: exact Chan/Welford combine of per-image partials ----
    cnt = float(h_out * w_out)
    mean_i = stats[:, :, 0] / cnt                       # (N, Cout_pad)
    m2_i = stats[:, :, 1]                               # (N, Cout_pad)
    mean = jnp.mean(mean_i, axis=0)                     # (Cout_pad,)
    m2 = jnp.sum(m2_i, axis=0) + cnt * jnp.sum((mean_i - mean) ** 2, axis=0)
    var = m2 / (cnt * n)                                # biased, as BN uses
    inv_std = lax.rsqrt(var + BN_EPS)
    g32 = jnp.pad(gamma.astype(jnp.float32), (0, cout_pad - cout))
    b32 = jnp.pad(beta.astype(jnp.float32), (0, cout_pad - cout))
    bn_scale = (g32 * inv_std).reshape(1, cout_pad, 1, 1)
    bn_shift = (b32 - mean * g32 * inv_std).reshape(1, cout_pad, 1, 1)

    # ---------------- pass 2: BN + ReLU + de-widen, NCHW written directly ----
    # lw == h_out * wp exactly -> this reshape is a free dim-split (bitcast).
    conv4 = conv_wide.reshape(n, cout_pad, h_out, wp)
    kernel2 = functools.partial(_bn_relu_kernel, w_out=w_out)
    y = pl.pallas_call(
        kernel2,
        out_shape=jax.ShapeDtypeStruct((n, cout_pad, h_out, w_out),
                                       jnp.float32),
        grid=(n, n_co),
        in_specs=[
            pl.BlockSpec((1, cout_blk, h_out, wp), lambda i, c: (i, c, 0, 0)),
            pl.BlockSpec((1, cout_blk, 1, 1), lambda i, c: (0, c, 0, 0)),
            pl.BlockSpec((1, cout_blk, 1, 1), lambda i, c: (0, c, 0, 0)),
        ],
        out_specs=pl.BlockSpec((1, cout_blk, h_out, w_out),
                               lambda i, c: (i, c, 0, 0)),
        compiler_params=pltpu.CompilerParams(
            dimension_semantics=("parallel", "parallel"),
            vmem_limit_bytes=vmem_limit),
    )(conv4, bn_scale, bn_shift)

    if cout_pad != cout:        # only when planes is not a multiple of 8
        y = y[:, :cout]
    return y


def reference_forward(x_nchw, weight_oikk, gamma, beta, *, kernel_size,
                      padding, dilation):
    """Pure-JAX f32 reference (lax conv + training-mode BN + ReLU)."""
    conv = lax.conv_general_dilated(
        x_nchw, weight_oikk, window_strides=(1, 1),
        padding=((padding, padding), (padding, padding)),
        rhs_dilation=(dilation, dilation),
        dimension_numbers=("NCHW", "OIHW", "NCHW"))
    mean = jnp.mean(conv, axis=(0, 2, 3), keepdims=True)
    var = jnp.mean((conv - mean) ** 2, axis=(0, 2, 3), keepdims=True)
    y = (conv - mean) * lax.rsqrt(var + BN_EPS)
    y = y * gamma.reshape(1, -1, 1, 1) + beta.reshape(1, -1, 1, 1)
    return jnp.maximum(y, 0.0)


if __name__ == "__main__":
    # ASPPModule(inplanes=4, planes=8, kernel_size=3, padding=2, dilation=2,
    #            norm_fn=nn.BatchNorm2d, bias=False, mode='kaiming')
    inplanes, planes = 4, 8
    kernel_size, padding, dilation = 3, 2, 2
    N, H, W = 2, 16, 16

    key = jax.random.PRNGKey(0)
    kx, kw = jax.random.split(key)

    x = jax.random.normal(kx, (N, inplanes, H, W), dtype=jnp.float32)

    # kaiming_normal_ (fan_in, gain=sqrt(2)): std = sqrt(2 / fan_in)
    fan_in = inplanes * kernel_size * kernel_size
    std = float(np.sqrt(2.0 / fan_in))
    weight = std * jax.random.normal(
        kw, (planes, inplanes, kernel_size, kernel_size), dtype=jnp.float32)

    # BatchNorm2d init: weight (gamma) = 1, bias (beta) = 0
    gamma = jnp.ones((planes,), dtype=jnp.float32)
    beta = jnp.zeros((planes,), dtype=jnp.float32)

    out = aspp_forward(x, weight, gamma, beta, kernel_size=kernel_size,
                       padding=padding, dilation=dilation)
    out = jax.block_until_ready(out)

    ref = jax.block_until_ready(
        reference_forward(x, weight, gamma, beta, kernel_size=kernel_size,
                          padding=padding, dilation=dilation))

    assert out.shape == (N, planes, H, W), out.shape
    # Tolerance covers the intentional bf16 quantization of both the MXU
    # inputs and the conv_wide intermediate (accumulation / BN math are f32).
    np.testing.assert_allclose(np.asarray(out), np.asarray(ref),
                               rtol=4e-2, atol=4e-2)
    print("KERNEL_OK")
</pallas_src>

<mosaic_0001>
module attributes {stable_mosaic.version = 11 : i64} {
  func.func @_conv_stats_kernel(%arg0: i32, %arg1: i32, %arg2: i32, %arg3: memref<1x8x512xbf16, #tpu.memory_space<vmem>>, %arg4: memref<1x8x72xbf16, #tpu.memory_space<vmem>>, %arg5: memref<1x320xf32, #tpu.memory_space<vmem>>, %arg6: memref<1x8x320xbf16, #tpu.memory_space<vmem>>, %arg7: memref<1x8x2xf32, #tpu.memory_space<vmem>>, %arg8: memref<8x320xf32, #tpu.memory_space<vmem>>, %arg9: memref<72x320xbf16, #tpu.memory_space<vmem>>) attributes {dimension_semantics = [#tpu.dimension_semantics<parallel>, #tpu.dimension_semantics<parallel>, #tpu.dimension_semantics<arbitrary>], iteration_bounds = array<i64: 2, 1, 1>, scalar_prefetch = 0 : i64, scratch_operands = 2 : i64, tpu.core_type = #tpu.core_type<tc>, window_params = [{transform_indices = @transform_0, window_bounds = array<i64: 1, 8, 512>}, {transform_indices = @transform_1, window_bounds = array<i64: 1, 8, 72>}, {pipeline_mode = #tpu.pipeline_mode<synchronous>, transform_indices = @transform_2, window_bounds = array<i64: 1, 320>}, {transform_indices = @transform_3, window_bounds = array<i64: 1, 8, 320>}, {transform_indices = @transform_4, window_bounds = array<i64: 1, 8, 2>}]} {
    %c0_i32 = arith.constant 0 : i32
    %0 = arith.cmpi eq, %arg2, %c0_i32 : i32
    %1 = arith.extui %0 : i1 to i32
    %c0_i32_0 = arith.constant 0 : i32
    %2 = arith.cmpi ne, %1, %c0_i32_0 : i32
    scf.if %2 {
      %cst_41 = arith.constant 0.000000e+00 : f32
      %40 = vector.broadcast %cst_41 : f32 to vector<8x320xf32>
      %c0_42 = arith.constant 0 : index
      %c0_43 = arith.constant 0 : index
      %41 = vector.load %arg8[%c0_42, %c0_43] : memref<8x320xf32, #tpu.memory_space<vmem>>, vector<8x320xf32>
      tpu.vector_store %arg8[%c0_42, %c0_43], %40 {strides = array<i32>} : memref<8x320xf32, #tpu.memory_space<vmem>>, vector<8x320xf32>,
    } else {
    }
    %c0 = arith.constant 0 : index
    %c0_1 = arith.constant 0 : index
    %c0_2 = arith.constant 0 : index
    %3 = vector.load %arg3[%c0, %c0_1, %c0_2] : memref<1x8x512xbf16, #tpu.memory_space<vmem>>, vector<1x8x320xbf16>
    %4 = vector.shape_cast %3 : vector<1x8x320xbf16> to vector<8x320xbf16>
    %c0_3 = arith.constant 0 : index
    %c0_4 = arith.constant 0 : index
    %5 = vector.load %arg9[%c0_3, %c0_4] : memref<72x320xbf16, #tpu.memory_space<vmem>>, vector<8x320xbf16>
    tpu.vector_store %arg9[%c0_3, %c0_4], %4 {strides = array<i32>} : memref<72x320xbf16, #tpu.memory_space<vmem>>, vector<8x320xbf16>,
    %c0_5 = arith.constant 0 : index
    %c0_6 = arith.constant 0 : index
    %c2 = arith.constant 2 : index
    %6 = vector.load %arg3[%c0_5, %c0_6, %c2] : memref<1x8x512xbf16, #tpu.memory_space<vmem>>, vector<1x8x320xbf16>
    %7 = vector.shape_cast %6 : vector<1x8x320xbf16> to vector<8x320xbf16>
    %c8 = arith.constant 8 : index
    %c0_7 = arith.constant 0 : index
    %8 = vector.load %arg9[%c8, %c0_7] : memref<72x320xbf16, #tpu.memory_space<vmem>>, vector<8x320xbf16>
    tpu.vector_store %arg9[%c8, %c0_7], %7 {strides = array<i32>} : memref<72x320xbf16, #tpu.memory_space<vmem>>, vector<8x320xbf16>,
    %c0_8 = arith.constant 0 : index
    %c0_9 = arith.constant 0 : index
    %c4 = arith.constant 4 : index
    %9 = vector.load %arg3[%c0_8, %c0_9, %c4] : memref<1x8x512xbf16, #tpu.memory_space<vmem>>, vector<1x8x320xbf16>
    %10 = vector.shape_cast %9 : vector<1x8x320xbf16> to vector<8x320xbf16>
    %c16 = arith.constant 16 : index
    %c0_10 = arith.constant 0 : index
    %11 = vector.load %arg9[%c16, %c0_10] : memref<72x320xbf16, #tpu.memory_space<vmem>>, vector<8x320xbf16>
    tpu.vector_store %arg9[%c16, %c0_10], %10 {strides = array<i32>} : memref<72x320xbf16, #tpu.memory_space<vmem>>, vector<8x320xbf16>,
    %c0_11 = arith.constant 0 : index
    %c0_12 = arith.constant 0 : index
    %c40 = arith.constant 40 : index
    %12 = vector.load %arg3[%c0_11, %c0_12, %c40] : memref<1x8x512xbf16, #tpu.memory_space<vmem>>, vector<1x8x320xbf16>
    %13 = vector.shape_cast %12 : vector<1x8x320xbf16> to vector<8x320xbf16>
    %c24 = arith.constant 24 : index
    %c0_13 = arith.constant 0 : index
    %14 = vector.load %arg9[%c24, %c0_13] : memref<72x320xbf16, #tpu.memory_space<vmem>>, vector<8x320xbf16>
    tpu.vector_store %arg9[%c24, %c0_13], %13 {strides = array<i32>} : memref<72x320xbf16, #tpu.memory_space<vmem>>, vector<8x320xbf16>,
    %c0_14 = arith.constant 0 : index
    %c0_15 = arith.constant 0 : index
    %c42 = arith.constant 42 : index
    %15 = vector.load %arg3[%c0_14, %c0_15, %c42] : memref<1x8x512xbf16, #tpu.memory_space<vmem>>, vector<1x8x320xbf16>
    %16 = vector.shape_cast %15 : vector<1x8x320xbf16> to vector<8x320xbf16>
    %c32 = arith.constant 32 : index
    %c0_16 = arith.constant 0 : index
    %17 = vector.load %arg9[%c32, %c0_16] : memref<72x320xbf16, #tpu.memory_space<vmem>>, vector<8x320xbf16>
    tpu.vector_store %arg9[%c32, %c0_16], %16 {strides = array<i32>} : memref<72x320xbf16, #tpu.memory_space<vmem>>, vector<8x320xbf16>,
    %c0_17 = arith.constant 0 : index
    %c0_18 = arith.constant 0 : index
    %c44 = arith.constant 44 : index
    %18 = vector.load %arg3[%c0_17, %c0_18, %c44] : memref<1x8x512xbf16, #tpu.memory_space<vmem>>, vector<1x8x320xbf16>
    %19 = vector.shape_cast %18 : vector<1x8x320xbf16> to vector<8x320xbf16>
    %c40_19 = arith.constant 40 : index
    %c0_20 = arith.constant 0 : index
    %20 = vector.load %arg9[%c40_19, %c0_20] : memref<72x320xbf16, #tpu.memory_space<vmem>>, vector<8x320xbf16>
    tpu.vector_store %arg9[%c40_19, %c0_20], %19 {strides = array<i32>} : memref<72x320xbf16, #tpu.memory_space<vmem>>, vector<8x320xbf16>,
    %c0_21 = arith.constant 0 : index
    %c0_22 = arith.constant 0 : index
    %c80 = arith.constant 80 : index
    %21 = vector.load %arg3[%c0_21, %c0_22, %c80] : memref<1x8x512xbf16, #tpu.memory_space<vmem>>, vector<1x8x320xbf16>
    %22 = vector.shape_cast %21 : vector<1x8x320xbf16> to vector<8x320xbf16>
    %c48 = arith.constant 48 : index
    %c0_23 = arith.constant 0 : index
    %23 = vector.load %arg9[%c48, %c0_23] : memref<72x320xbf16, #tpu.memory_space<vmem>>, vector<8x320xbf16>
    tpu.vector_store %arg9[%c48, %c0_23], %22 {strides = array<i32>} : memref<72x320xbf16, #tpu.memory_space<vmem>>, vector<8x320xbf16>,
    %c0_24 = arith.constant 0 : index
    %c0_25 = arith.constant 0 : index
    %c82 = arith.constant 82 : index
    %24 = vector.load %arg3[%c0_24, %c0_25, %c82] : memref<1x8x512xbf16, #tpu.memory_space<vmem>>, vector<1x8x320xbf16>
    %25 = vector.shape_cast %24 : vector<1x8x320xbf16> to vector<8x320xbf16>
    %c56 = arith.constant 56 : index
    %c0_26 = arith.constant 0 : index
    %26 = vector.load %arg9[%c56, %c0_26] : memref<72x320xbf16, #tpu.memory_space<vmem>>, vector<8x320xbf16>
    tpu.vector_store %arg9[%c56, %c0_26], %25 {strides = array<i32>} : memref<72x320xbf16, #tpu.memory_space<vmem>>, vector<8x320xbf16>,
    %c0_27 = arith.constant 0 : index
    %c0_28 = arith.constant 0 : index
    %c84 = arith.constant 84 : index
    %27 = vector.load %arg3[%c0_27, %c0_28, %c84] : memref<1x8x512xbf16, #tpu.memory_space<vmem>>, vector<1x8x320xbf16>
    %28 = vector.shape_cast %27 : vector<1x8x320xbf16> to vector<8x320xbf16>
    %c64 = arith.constant 64 : index
    %c0_29 = arith.constant 0 : index
    %29 = vector.load %arg9[%c64, %c0_29] : memref<72x320xbf16, #tpu.memory_space<vmem>>, vector<8x320xbf16>
    tpu.vector_store %arg9[%c64, %c0_29], %28 {strides = array<i32>} : memref<72x320xbf16, #tpu.memory_space<vmem>>, vector<8x320xbf16>,
    %c0_30 = arith.constant 0 : index
    %c0_31 = arith.constant 0 : index
    %30 = vector.load %arg8[%c0_30, %c0_31] : memref<8x320xf32, #tpu.memory_space<vmem>>, vector<8x320xf32>
    %c0_32 = arith.constant 0 : index
    %c0_33 = arith.constant 0 : index
    %c0_34 = arith.constant 0 : index
    %31 = vector.load %arg4[%c0_32, %c0_33, %c0_34] : memref<1x8x72xbf16, #tpu.memory_space<vmem>>, vector<1x8x72xbf16>
    %32 = vector.shape_cast %31 : vector<1x8x72xbf16> to vector<8x72xbf16>
    %c0_35 = arith.constant 0 : index
    %c0_36 = arith.constant 0 : index
    %33 = vector.load %arg9[%c0_35, %c0_36] : memref<72x320xbf16, #tpu.memory_space<vmem>>, vector<72x320xbf16>
    %cst = arith.constant dense<0.000000e+00> : vector<8x320xf32>
    %34 = tpu.matmul %32, %33, %cst {dimension_numbers = #tpu.dot_dimension_numbers<[1], [0], [0], [1], [0, 0, 1, 1], [], []>} : vector<8x72xbf16>, vector<72x320xbf16>, vector<8x320xf32> -> vector<8x320xf32>
    %35 = arith.addf %30, %34 : vector<8x320xf32>
    %c0_37 = arith.constant 0 : index
    %c0_38 = arith.constant 0 : index
    %36 = vector.load %arg8[%c0_37, %c0_38] : memref<8x320xf32, #tpu.memory_space<vmem>>, vector<8x320xf32>
    tpu.vector_store %arg8[%c0_37, %c0_38], %35 {strides = array<i32>} : memref<8x320xf32, #tpu.memory_space<vmem>>, vector<8x320xf32>,
    %c0_i32_39 = arith.constant 0 : i32
    %37 = arith.cmpi eq, %arg2, %c0_i32_39 : i32
    %38 = arith.extui %37 : i1 to i32
    %c0_i32_40 = arith.constant 0 : i32
    %39 = arith.cmpi ne, %38, %c0_i32_40 : i32
    scf.if %39 {
      %c0_41 = arith.constant 0 : index
      %c0_42 = arith.constant 0 : index
      %40 = vector.load %arg8[%c0_41, %c0_42] : memref<8x320xf32, #tpu.memory_space<vmem>>, vector<8x320xf32>
      %41 = arith.truncf %40 : vector<8x320xf32> to vector<8x320xbf16>
      %c0_43 = arith.constant 0 : index
      %c0_44 = arith.constant 0 : index
      %c0_45 = arith.constant 0 : index
      %42 = vector.load %arg6[%c0_43, %c0_44, %c0_45] : memref<1x8x320xbf16, #tpu.memory_space<vmem>>, vector<1x8x320xbf16>
      %43 = vector.shape_cast %42 : vector<1x8x320xbf16> to vector<8x320xbf16>
      %44 = vector.shape_cast %41 : vector<8x320xbf16> to vector<1x8x320xbf16>
      tpu.vector_store %arg6[%c0_43, %c0_44, %c0_45], %44 {strides = array<i32>} : memref<1x8x320xbf16, #tpu.memory_space<vmem>>, vector<1x8x320xbf16>,
      %c0_46 = arith.constant 0 : index
      %c0_47 = arith.constant 0 : index
      %45 = vector.load %arg5[%c0_46, %c0_47] : memref<1x320xf32, #tpu.memory_space<vmem>>, vector<1x320xf32>
      %46 = vector.broadcast %45 : vector<1x320xf32> to vector<8x320xf32>
      %47 = arith.mulf %40, %46 : vector<8x320xf32>
      %cst_48 = arith.constant dense<0.000000e+00> : vector<8xf32>
      %48 = vector.multi_reduction <add>, %47, %cst_48 [1] : vector<8x320xf32> to vector<8xf32>
      %49 = vector.shape_cast %48 : vector<8xf32> to vector<8x1xf32>
      %cst_49 = arith.constant 3.906250e-03 : f32
      %50 = vector.broadcast %cst_49 : f32 to vector<8x1xf32>
      %51 = arith.mulf %49, %50 : vector<8x1xf32>
      %52 = vector.broadcast %51 : vector<8x1xf32> to vector<8x320xf32>
      %53 = arith.subf %40, %52 : vector<8x320xf32>
      %54 = vector.broadcast %45 : vector<1x320xf32> to vector<8x320xf32>
      %55 = arith.mulf %53, %54 : vector<8x320xf32>
      %56 = arith.mulf %55, %55 : vector<8x320xf32>
      %cst_50 = arith.constant dense<0.000000e+00> : vector<8xf32>
      %57 = vector.multi_reduction <add>, %56, %cst_50 [1] : vector<8x320xf32> to vector<8xf32>
      %58 = vector.shape_cast %57 : vector<8xf32> to vector<8x1xf32>
      %c0_51 = arith.constant 0 : index
      %c0_52 = arith.constant 0 : index
      %c0_53 = arith.constant 0 : index
      %59 = vector.load %arg7[%c0_51, %c0_52, %c0_53] : memref<1x8x2xf32, #tpu.memory_space<vmem>>, vector<1x8x1xf32>
      %60 = vector.shape_cast %59 : vector<1x8x1xf32> to vector<8x1xf32>
      %61 = vector.shape_cast %49 : vector<8x1xf32> to vector<1x8x1xf32>
      tpu.vector_store %arg7[%c0_51, %c0_52, %c0_53], %61 {strides = array<i32>} : memref<1x8x2xf32, #tpu.memory_space<vmem>>, vector<1x8x1xf32>,
      %c0_54 = arith.constant 0 : index
      %c0_55 = arith.constant 0 : index
      %c1 = arith.constant 1 : index
      %62 = vector.load %arg7[%c0_54, %c0_55, %c1] : memref<1x8x2xf32, #tpu.memory_space<vmem>>, vector<1x8x1xf32>
      %63 = vector.shape_cast %62 : vector<1x8x1xf32> to vector<8x1xf32>
      %64 = vector.shape_cast %58 : vector<8x1xf32> to vector<1x8x1xf32>
      tpu.vector_store %arg7[%c0_54, %c0_55, %c1], %64 {strides = array<i32>} : memref<1x8x2xf32, #tpu.memory_space<vmem>>, vector<1x8x1xf32>,
    } else {
    }
    return
  }
  func.func @transform_0(%arg0: i32, %arg1: i32, %arg2: i32) -> (i32, i32, i32) {
    %c0_i32 = arith.constant 0 : i32
    %c0_i32_0 = arith.constant 0 : i32
    return %arg0, %arg2, %c0_i32 : i32, i32, i32
  }
  func.func @transform_1(%arg0: i32, %arg1: i32, %arg2: i32) -> (i32, i32, i32) {
    %c0_i32 = arith.constant 0 : i32
    %c0_i32_0 = arith.constant 0 : i32
    return %arg2, %arg1, %c0_i32 : i32, i32, i32
  }
  func.func @transform_2(%arg0: i32, %arg1: i32, %arg2: i32) -> (i32, i32) {
    %c0_i32 = arith.constant 0 : i32
    %c0_i32_0 = arith.constant 0 : i32
    %c0_i32_1 = arith.constant 0 : i32
    return %c0_i32, %c0_i32_0 : i32, i32
  }
  func.func @transform_3(%arg0: i32, %arg1: i32, %arg2: i32) -> (i32, i32, i32) {
    %c0_i32 = arith.constant 0 : i32
    %c0_i32_0 = arith.constant 0 : i32
    return %arg0, %arg1, %c0_i32 : i32, i32, i32
  }
  func.func @transform_4(%arg0: i32, %arg1: i32, %arg2: i32) -> (i32, i32, i32) {
    %c0_i32 = arith.constant 0 : i32
    %c0_i32_0 = arith.constant 0 : i32
    return %arg0, %arg1, %c0_i32 : i32, i32, i32
  }
}

</mosaic_0001>

<llo_original>
// kernel: tpu_custom_call.1
$region0: #{tpu_custom_call.1}
  #allocation0 [shape = 'u32[]', space=smem, size = 0x4, offset = 0x4, fixed_abs, tag = 'smem constant byte address 0x4 - core index']
  #allocation1 [shape = 'u32[144,128]{1,0:T(1,128)}', space=vmem, size = 0x12000, scoped, tag = 'internal scratch']
  #allocation2 [shape = 'f32[8,320]{1,0:T(8,128)}', space=vmem, size = 0x3000, scoped, tag = 'scratch operand']
  #allocation3 [shape = 'bf16[72,320]{1,0:T(8,128)(2,1)}', space=vmem, size = 0xd800, scoped, tag = 'scratch operand']
  %s0 = inlined_call_operand.hbm [shape: bf16[2,8,512], index: 0, kind: input, shape index: {}]
  %s1 = inlined_call_operand.hbm [shape: bf16[1,8,72], index: 1, kind: input, shape index: {}]
  %s2 = inlined_call_operand.vmem [shape: f32[1,320], index: 2, kind: input, shape index: {}]
  %s3 = inlined_call_operand.hbm [shape: bf16[2,8,320], index: 3, kind: output, shape index: {0}]
  %s4 = inlined_call_operand.vmem [shape: f32[2,8,2], index: 4, kind: output, shape index: {1}]
  %5 = xla_tuple %s3, %s4
  %s6 = sld [smem:[#allocation0]]
  $region69: #{tpu_custom_call.1} parent=0
    _
  %s8 = ssub.s32 1, %s6
  %s9 = scalar_select 0, %s8, %s6
  $region1: #{tpu_custom_call.1} parent=0
    #allocation4 [shape = 'u8[16384]{0}', space=vmem, size = 0x4000, scoped, tag = 'input window, operand 0']
    #allocation5 [shape = 's32[2]{0}', space=sflag, size = 0x8, scoped, tag = 'scoped memory for tpu_custom_call.1']
    #allocation6 [shape = 's32[2]{0}', space=sflag, size = 0x8, scoped, tag = 'scoped memory for tpu_custom_call.1']
    #allocation7 [shape = 'u8[2048]{0}', space=vmem, size = 0x800, scoped, tag = 'input window, operand 1, single buffered']
    #allocation8 [shape = 's32[1]{0}', space=sflag, size = 0x4, scoped, tag = 'scoped memory for tpu_custom_call.1']
    #allocation9 [shape = 'u8[12288]{0}', space=vmem, size = 0x3000, scoped, tag = 'output window, operand 0']
    %10 = vsyncpa [#allocation5], 0
    %s11 = scalar_lea.sflag [#allocation5], 1
    %12 = vsyncpa %s11, 0
    %13 = vsyncpa [#allocation8], 0
    %14 = vsyncpa [#allocation6], 0
    %s15 = scalar_lea.sflag [#allocation6], 1
    %16 = vsyncpa %s15, 0
    loop: start=0, step=1, limit=4
    $region2: #{tpu_custom_call.1} parent=1 // loop_pre_header
      _
    $region3: #{tpu_custom_call.1} parent=1 // loop_header
      %s18 = sphi 0, %s22
      %p19 = scmp.ge.s32.totalorder %s18, 4
      %s25 = sphi 0, %s44
      %s26 = sphi 0, %s40
      %s27 = sphi 0, %s36
      %s28 = sphi 0, %s25
      %s29 = sphi 0, %s26
      %s30 = sphi 0, %s27
      %s31 = sphi 0, %s28
      %s32 = sphi 0, %s29
      %s33 = sphi 0, %s30
      %s49 = sphi 0, %s51
      %s52 = sphi 0, %s49
      %s53 = sphi 0, %s52
      %s69 = sphi 0, %s53
      %s77 = sphi 0, %s79
      %s80 = sphi 0, %s77
      %s81 = sphi 0, %s80
      %s97 = sphi 0, %s81
      %s101 = sphi 0, %s101
      %s103 = sphi 0, %s101
      %s104 = sphi 0, %s103
      %s118 = sphi 0, %s104
      %s126 = sphi 0, %s128
      %s129 = sphi 0, %s126
      %s130 = sphi 0, %s129
      %s146 = sphi 0, %s130
      %s154 = sphi 0, %s156
      %s157 = sphi 0, %s154
      %s158 = sphi 0, %s157
      %s174 = sphi 0, %s158
    $region4: #{tpu_custom_call.1} parent=1 // loop_header_branch
      %21 = sbr.rel (%p19) target = $region8
    $region5: #{tpu_custom_call.1} parent=1 // loop_body
      %s23 = ssub.s32 %s18, 1
      %s24 = ssub.s32 %s18, 2
      %s34 = sadd.s32 1, %s27
      %p35 = scmp.ge.s32.totalorder %s34, 1
      %s36 = scalar_select %p35, 0, %s34
      %s37 = sadd.s32 1, %s26
      %s38 = scalar_select %p35, %s37, %s26
      %p39 = scmp.ge.s32.totalorder %s38, 1
      %s40 = scalar_select %p39, 0, %s38
      %s41 = sadd.s32 1, %s25
      %s42 = scalar_select %p39, %s41, %s25
      %p43 = scmp.ge.s32.totalorder %s42, 2
      %s44 = scalar_select %p43, 0, %s42
      %s45 = ssub.s32 %s25, %s44
      %s46 = ssub.s32 %s27, %s36
      %s47 = sor.u32 %s45, %s46
      %p48 = scmp.eq.s32.totalorder %s47, 0
      %s50 = sadd.s32 %s49, 1
      %s51 = scalar_select %p48, %s49, %s50
      %p54 = pneg %p48
      %p55 = scmp.eq.s32.totalorder %s18, 1
      %p56 = por %p54, %p55
      %p57 = scmp.ne.s32.totalorder %s49, %s52
      %p58 = scmp.eq.s32.totalorder %s18, 0
      %p59 = por %p57, %p58
      %p60 = scmp.ne.s32.totalorder %s49, %s52
      %p61 = scmp.eq.s32.totalorder %s23, 1
      %p62 = por %p60, %p61
      %p63 = scmp.ne.s32.totalorder %s52, %s53
      %p64 = scmp.eq.s32.totalorder %s23, 0
      %p65 = por %p63, %p64
      %p66 = scmp.ne.s32.totalorder %s52, %s53
      %p67 = scmp.eq.s32.totalorder %s24, 1
      %p68 = por %p66, %p67
      %p70 = scmp.ne.s32.totalorder %s53, %s69
      %p71 = scmp.eq.s32.totalorder %s24, 0
      %p72 = por %p70, %p71
      %s73 = ssub.s32 %s27, %s36
      %s74 = ssub.s32 %s26, %s40
      %s75 = sor.u32 %s73, %s74
      %p76 = scmp.eq.s32.totalorder %s75, 0
      %s78 = sadd.s32 %s77, 1
      %s79 = scalar_select %p76, %s77, %s78
      %p82 = pneg %p76
      %p83 = scmp.eq.s32.totalorder %s18, 1
      %p84 = por %p82, %p83
      %p85 = scmp.ne.s32.totalorder %s77, %s80
      %p86 = scmp.eq.s32.totalorder %s18, 0
      %p87 = por %p85, %p86
      %p88 = scmp.ne.s32.totalorder %s77, %s80
      %p89 = scmp.eq.s32.totalorder %s23, 1
      %p90 = por %p88, %p89
      %p91 = scmp.ne.s32.totalorder %s80, %s81
      %p92 = scmp.eq.s32.totalorder %s23, 0
      %p93 = por %p91, %p92
      %p94 = scmp.ne.s32.totalorder %s80, %s81
      %p95 = scmp.eq.s32.totalorder %s24, 1
      %p96 = por %p94, %p95
      %p98 = scmp.ne.s32.totalorder %s81, %s97
      %p99 = scmp.eq.s32.totalorder %s24, 0
      %p100 = por %p98, %p99
      %s102 = sadd.s32 %s101, 1
      %p105 = scmp.eq.s32.totalorder %s18, 1
      %p106 = scmp.ne.s32.totalorder %s101, %s103
      %p107 = scmp.eq.s32.totalorder %s18, 0
      %p108 = por %p106, %p107
      %p109 = scmp.ne.s32.totalorder %s101, %s103
      %p110 = scmp.eq.s32.totalorder %s23, 1
      %p111 = por %p109, %p110
      %p112 = scmp.ne.s32.totalorder %s103, %s104
      %p113 = scmp.eq.s32.totalorder %s23, 0
      %p114 = por %p112, %p113
      %p115 = scmp.ne.s32.totalorder %s103, %s104
      %p116 = scmp.eq.s32.totalorder %s24, 1
      %p117 = por %p115, %p116
      %p119 = scmp.ne.s32.totalorder %s104, %s118
      %p120 = scmp.eq.s32.totalorder %s24, 0
      %p121 = por %p119, %p120
      %s122 = ssub.s32 %s25, %s44
      %s123 = ssub.s32 %s26, %s40
      %s124 = sor.u32 %s122, %s123
      %p125 = scmp.eq.s32.totalorder %s124, 0
      %s127 = sadd.s32 %s126, 1
      %s128 = scalar_select %p125, %s126, %s127
      %p131 = pneg %p125
      %p132 = scmp.eq.s32.totalorder %s18, 1
      %p133 = por %p131, %p132
      %p134 = scmp.ne.s32.totalorder %s126, %s129
      %p135 = scmp.eq.s32.totalorder %s18, 0
      %p136 = por %p134, %p135
      %p137 = scmp.ne.s32.totalorder %s126, %s129
      %p138 = scmp.eq.s32.totalorder %s23, 1
      %p139 = por %p137, %p138
      %p140 = scmp.ne.s32.totalorder %s129, %s130
      %p141 = scmp.eq.s32.totalorder %s23, 0
      %p142 = por %p140, %p141
      %p143 = scmp.ne.s32.totalorder %s129, %s130
      %p144 = scmp.eq.s32.totalorder %s24, 1
      %p145 = por %p143, %p144
      %p147 = scmp.ne.s32.totalorder %s130, %s146
      %p148 = scmp.eq.s32.totalorder %s24, 0
      %p149 = por %p147, %p148
      %s150 = ssub.s32 %s25, %s44
      %s151 = ssub.s32 %s26, %s40
      %s152 = sor.u32 %s150, %s151
      %p153 = scmp.eq.s32.totalorder %s152, 0
      %s155 = sadd.s32 %s154, 1
      %s156 = scalar_select %p153, %s154, %s155
      %p159 = pneg %p153
      %p160 = scmp.eq.s32.totalorder %s18, 1
      %p161 = por %p159, %p160
      %p162 = scmp.ne.s32.totalorder %s154, %s157
      %p163 = scmp.eq.s32.totalorder %s18, 0
      %p164 = por %p162, %p163
      %p165 = scmp.ne.s32.totalorder %s154, %s157
      %p166 = scmp.eq.s32.totalorder %s23, 1
      %p167 = por %p165, %p166
      %p168 = scmp.ne.s32.totalorder %s157, %s158
      %p169 = scmp.eq.s32.totalorder %s23, 0
      %p170 = por %p168, %p169
      %p171 = scmp.ne.s32.totalorder %s157, %s158
      %p172 = scmp.eq.s32.totalorder %s24, 1
      %p173 = por %p171, %p172
      %p175 = scmp.ne.s32.totalorder %s158, %s174
      %p176 = scmp.eq.s32.totalorder %s24, 0
      %p177 = por %p175, %p176
      %p178 = scmp.le.s32.totalorder 1, %s18
      %p179 = scmp.lt.s32.totalorder %s18, 3
      %p180 = pnand %p178, %p179
      %p181 = pneg %p180
      // Predicated region
      $region9: #{tpu_custom_call.1} parent=5 // pred_check
        _
      $region10: #{tpu_custom_call.1} parent=5 // pred_check_branch
        %183 = sbr.rel (%p180) target = $region12
      $region11: #{tpu_custom_call.1} parent=5 // pred_region
        %s184 = ssub.s32 %s18, 1
        // Predicated region
        $region13: #{tpu_custom_call.1} parent=11 // pred_check
          %p185 = pneg %p93
        $region14: #{tpu_custom_call.1} parent=11 // pred_check_branch
          %187 = sbr.rel (%p185) target = $region16
        $region15: #{tpu_custom_call.1} parent=11 // pred_region
          %s189 = ssub.s32 64, 64
          %190 = vsyncadd [#allocation8], %s189
          %s191 = sadd.s32 %s29, %s30
          %s192 = smul.addr %s191, 64
          %s193 = scalar_lea.hbm %s1, %s192
          %s195 = sshll.u32 [#allocation7], 4
          %s196 = int_to_ptr.vmem [resolvable:$true] %s195
          %198 = dma.hbm_to_vmem [thread:$0]  %s193, 64, %s196, [#allocation8]
        $region16: #{tpu_custom_call.1} parent=11 // pred_fallthru
          _
        // Predicated region
        $region17: #{tpu_custom_call.1} parent=11 // pred_check
          %p199 = pneg %p114
        $region18: #{tpu_custom_call.1} parent=11 // pred_check_branch
          %201 = sbr.rel (%p199) target = $region20
        $region19: #{tpu_custom_call.1} parent=11 // pred_region
          _
        $region20: #{tpu_custom_call.1} parent=11 // pred_fallthru
          _
      $region12: #{tpu_custom_call.1} parent=5 // pred_fallthru
        _
      %p202 = scmp.lt.s32.totalorder %s18, 2
      // Predicated region
      $region21: #{tpu_custom_call.1} parent=5 // pred_check
        %p203 = pneg %p202
      $region22: #{tpu_custom_call.1} parent=5 // pred_check_branch
        %205 = sbr.rel (%p203) target = $region24
      $region23: #{tpu_custom_call.1} parent=5 // pred_region
        // Predicated region
        $region25: #{tpu_custom_call.1} parent=23 // pred_check
          %p206 = pneg %p59
        $region26: #{tpu_custom_call.1} parent=23 // pred_check_branch
          %208 = sbr.rel (%p206) target = $region28
        $region27: #{tpu_custom_call.1} parent=23 // pred_region
          %s209 = sand.u32 %s49, 1
          %s210 = scalar_lea.sflag [#allocation5], %s209
          %s211 = sand.u32 %s49, 1
          %s212 = smul.addr %s211, 16
          %s213 = scalar_lea.vmem [#allocation4], %s212
          %s215 = ssub.s32 256, 256
          %216 = vsyncadd %s210, %s215
          %s217 = smul.addr %s27, 4
          %s218 = smul.addr %s25, 4
          %s219 = sadd.s32 %s217, %s218
          %s220 = smul.addr %s219, 64
          %s221 = scalar_lea.hbm %s0, %s220
          %s223 = sshll.u32 %s213, 4
          %s224 = int_to_ptr.vmem [resolvable:$true] %s223
          %226 = dma.hbm_to_vmem [thread:$0]  %s221, 256, %s224, %s210
        $region28: #{tpu_custom_call.1} parent=23 // pred_fallthru
          _
      $region24: #{tpu_custom_call.1} parent=5 // pred_fallthru
        _
      %p227 = scmp.le.s32.totalorder 1, %s18
      %p228 = scmp.lt.s32.totalorder %s18, 3
      %p229 = pnand %p227, %p228
      %p230 = pneg %p229
      // Predicated region
      $region29: #{tpu_custom_call.1} parent=5 // pred_check
        _
      $region30: #{tpu_custom_call.1} parent=5 // pred_check_branch
        %232 = sbr.rel (%p229) target = $region32
      $region31: #{tpu_custom_call.1} parent=5 // pred_region
        %s233 = ssub.s32 %s18, 1
        %s234 = sand.u32 %s52, 1
        %s235 = scalar_lea.sflag [#allocation5], %s234
        %s236 = sand.u32 %s52, 1
        %s237 = smul.addr %s236, 16
        %s238 = scalar_lea.vmem [#allocation4], %s237
        // Predicated region
        $region33: #{tpu_custom_call.1} parent=31 // pred_check
          %p239 = pneg %p65
        $region34: #{tpu_custom_call.1} parent=31 // pred_check_branch
          %241 = sbr.rel (%p239) target = $region36
        $region35: #{tpu_custom_call.1} parent=31 // pred_region
          %242 = dma.done %s235, 256
        $region36: #{tpu_custom_call.1} parent=31 // pred_fallthru
          _
        // Predicated region
        $region37: #{tpu_custom_call.1} parent=31 // pred_check
          %p243 = pneg %p93
        $region38: #{tpu_custom_call.1} parent=31 // pred_check_branch
          %245 = sbr.rel (%p243) target = $region40
        $region39: #{tpu_custom_call.1} parent=31 // pred_region
          %246 = dma.done [#allocation8], 64
        $region40: #{tpu_custom_call.1} parent=31 // pred_fallthru
          _
        %s247 = sand.u32 %s52, 1
        %s248 = scalar_lea.sflag [#allocation5], %s247
        %s249 = sand.u32 %s52, 1
        %s250 = smul.addr %s249, 16
        %s251 = scalar_lea.vmem [#allocation4], %s250
        %p252 = pneg %p65
        %p253 = pneg %p62
        %p254 = pneg %p93
        %p255 = pneg %p90
        %p256 = pneg %p114
        %p257 = pneg %p111
        %p258 = pneg %p142
        %p259 = pneg %p139
        %s260 = sand.u32 %s129, 1
        %s261 = scalar_lea.sflag [#allocation6], %s260
        %s262 = sand.u32 %s129, 1
        %s263 = smul.addr %s262, 12
        %s264 = scalar_lea.vmem [#allocation9], %s263
        %p265 = pneg %p170
        %p266 = pneg %p167
        %p267 = scmp.lt.s32.totalorder %s28, 1
        %s268 = scalar_select %p267, %s28, 1
        %p269 = scmp.lt.s32.totalorder %s29, 0
        %s270 = scalar_select %p269, %s29, 0
        %s271 = sadd.s32 %s270, %s268
        %s272 = smul.addr %s271, 8
        %s273 = scalar_lea.vmem %s4, %s272
        %p274 = scmp.lt.s32.totalorder %s28, 1
        %s275 = scalar_select %p274, %s28, 1
        %p276 = scmp.lt.s32.totalorder %s29, 0
        %s277 = scalar_select %p276, %s29, 0
        %s278 = sadd.s32 %s277, %s275
        %s279 = smul.addr %s278, 8
        %s280 = scalar_lea.vmem %s4, %s279
        %p282 = scmp.eq.s32.totalorder %s30, 0
        // Predicated region
        $region41: #{tpu_custom_call.1} parent=31 // pred_check
          %p283 = pneg %p282
        $region42: #{tpu_custom_call.1} parent=31 // pred_check_branch
          %285 = sbr.rel (%p283) target = $region44
        $region43: #{tpu_custom_call.1} parent=31 // pred_region
          %286 = vst [vmem:[#allocation2] sm:$0xff] 0.0
          %287 = vst [vmem:[#allocation2 + $0x8] sm:$0xff] 0.0
          %vm288 = vcmask 523264
          %289 = vst.msk [vmem:[#allocation2 + $0x10] sm:$0xff] %vm288, 0.0
        $region44: #{tpu_custom_call.1} parent=31 // pred_fallthru
          _
        %v290 = vld [vmem:[%s238] sm:$0xff]
        %v291 = vld [vmem:[%s238 + $0x8] sm:$0xf]
        %292 = vst [vmem:[#allocation3] sm:$0xff] %v290
        %vm293 = vcmask 519168
        %294 = vst.msk [vmem:[#allocation3 + $0x8] sm:$0xf] %vm293, %v291
        %v295 = vld [vmem:[%s238] sm:$0xff]
        %v296 = vld [vmem:[%s238 + $0x8] sm:$0xf]
        %299 = vrot.lane.b32.xlu0 %v295, 126
        %v300 = vpop.permute.xlu0 %299
        %301 = vrot.lane.b32.xlu0 %v296, 126
        %v302 = vpop.permute.xlu0 %301
        %v303 = vrot.slane %v300, 4
        %v304 = vrot.slane %v302, 4
        %vm305 = vcmask 1043456
        %v306 = vsel %vm305, %v303, %v304
        %vm307 = vcmask 1031168
        %v308 = vsel %vm307, %v300, %v306
        %311 = vst [vmem:[#allocation3 + $0xc] sm:$0xff] %v308
        %312 = vst.msk [vmem:[#allocation3 + $0x14] sm:$0xf] %vm293, %v302
        %v313 = vld [vmem:[%s238] sm:$0xff]
        %v314 = vld [vmem:[%s238 + $0x8] sm:$0xf]
        %317 = vrot.lane.b32.xlu0 %v313, 124
        %v318 = vpop.permute.xlu0 %317
        %319 = vrot.lane.b32.xlu0 %v314, 124
        %v320 = vpop.permute.xlu0 %319
        %v321 = vrot.slane %v318, 4
        %v322 = vrot.slane %v320, 4
        %v323 = vsel %vm305, %v321, %v322
        %vm324 = vcmask 1014784
        %v325 = vsel %vm324, %v318, %v323
        %328 = vst [vmem:[#allocation3 + $0x18] sm:$0xff] %v325
        %329 = vst.msk [vmem:[#allocation3 + $0x20] sm:$0xf] %vm293, %v320
        %v330 = vld [vmem:[%s238] sm:$0xff]
        %v331 = vld [vmem:[%s238 + $0x8] sm:$0xf]
        %334 = vrot.lane.b32.xlu0 %v330, 88
        %v335 = vpop.permute.xlu0 %334
        %336 = vrot.lane.b32.xlu0 %v331, 88
        %v337 = vpop.permute.xlu0 %336
        %v338 = vrot.slane %v335, 4
        %v339 = vrot.slane %v337, 4
        %v340 = vsel %vm305, %v338, %v339
        %vm341 = vcmask 719872
        %v342 = vsel %vm341, %v335, %v340
        %345 = vst [vmem:[#allocation3 + $0x24] sm:$0xff] %v342
        %346 = vst.msk [vmem:[#allocation3 + $0x2c] sm:$0xf] %vm293, %v337
        %v347 = vld [vmem:[%s238] sm:$0xff]
        %v348 = vld [vmem:[%s238 + $0x8] sm:$0xf]
        %351 = vrot.lane.b32.xlu0 %v347, 86
        %v352 = vpop.permute.xlu0 %351
        %353 = vrot.lane.b32.xlu0 %v348, 86
        %v354 = vpop.permute.xlu0 %353
        %v355 = vrot.slane %v352, 4
        %v356 = vrot.slane %v354, 4
        %v357 = vsel %vm305, %v355, %v356
        %vm358 = vcmask 703488
        %v359 = vsel %vm358, %v352, %v357
        %362 = vst [vmem:[#allocation3 + $0x30] sm:$0xff] %v359
        %363 = vst.msk [vmem:[#allocation3 + $0x38] sm:$0xf] %vm293, %v354
        %v364 = vld [vmem:[%s238] sm:$0xff]
        %v365 = vld [vmem:[%s238 + $0x8] sm:$0xf]
        %368 = vrot.lane.b32.xlu0 %v364, 84
        %v369 = vpop.permute.xlu0 %368
        %370 = vrot.lane.b32.xlu0 %v365, 84
        %v371 = vpop.permute.xlu0 %370
        %v372 = vrot.slane %v369, 4
        %v373 = vrot.slane %v371, 4
        %v374 = vsel %vm305, %v372, %v373
        %vm375 = vcmask 687104
        %v376 = vsel %vm375, %v369, %v374
        %379 = vst [vmem:[#allocation3 + $0x3c] sm:$0xff] %v376
        %380 = vst.msk [vmem:[#allocation3 + $0x44] sm:$0xf] %vm293, %v371
        %v381 = vld [vmem:[%s238] sm:$0xff]
        %v382 = vld [vmem:[%s238 + $0x8] sm:$0xff]
        %385 = vrot.lane.b32.xlu0 %v381, 48
        %v386 = vpop.permute.xlu0 %385
        %387 = vrot.lane.b32.xlu0 %v382, 48
        %v388 = vpop.permute.xlu0 %387
        %v389 = vrot.slane %v386, 4
        %v390 = vrot.slane %v388, 4
        %v391 = vsel %vm305, %v389, %v390
        %vm392 = vcmask 392192
        %v393 = vsel %vm392, %v386, %v391
        %v394 = vsel %vm392, %v388, %v390
        %397 = vst [vmem:[#allocation3 + $0x48] sm:$0xff] %v393
        %398 = vst.msk [vmem:[#allocation3 + $0x50] sm:$0xf] %vm293, %v394
        %v399 = vld [vmem:[%s238] sm:$0xff]
        %v400 = vld [vmem:[%s238 + $0x8] sm:$0xff]
        %403 = vrot.lane.b32.xlu0 %v399, 46
        %v404 = vpop.permute.xlu0 %403
        %405 = vrot.lane.b32.xlu0 %v400, 46
        %v406 = vpop.permute.xlu0 %405
        %v407 = vrot.slane %v404, 4
        %v408 = vrot.slane %v406, 4
        %v409 = vsel %vm305, %v407, %v408
        %vm410 = vcmask 375808
        %v411 = vsel %vm410, %v404, %v409
        %v412 = vsel %vm410, %v406, %v408
        %415 = vst [vmem:[#allocation3 + $0x54] sm:$0xff] %v411
        %416 = vst.msk [vmem:[#allocation3 + $0x5c] sm:$0xf] %vm293, %v412
        %v417 = vld [vmem:[%s238] sm:$0xff]
        %v418 = vld [vmem:[%s238 + $0x8] sm:$0xff]
        %421 = vrot.lane.b32.xlu0 %v417, 44
        %v422 = vpop.permute.xlu0 %421
        %423 = vrot.lane.b32.xlu0 %v418, 44
        %v424 = vpop.permute.xlu0 %423
        %v425 = vrot.slane %v422, 4
        %v426 = vrot.slane %v424, 4
        %v427 = vsel %vm305, %v425, %v426
        %vm428 = vcmask 359424
        %v429 = vsel %vm428, %v422, %v427
        %v430 = vsel %vm428, %v424, %v426
        %433 = vst [vmem:[#allocation3 + $0x60] sm:$0xff] %v429
        %434 = vst.msk [vmem:[#allocation3 + $0x68] sm:$0xf] %vm293, %v430
        %v435 = vld [vmem:[#allocation2] sm:$0xff]
        %v436 = vld [vmem:[#allocation2 + $0x8] sm:$0xff]
        %v437 = vld [vmem:[#allocation2 + $0x10] sm:$0xff]
        %v438 = vld [vmem:[#allocation7] sm:$0xf]
        %v439 = vld [vmem:[#allocation3] sm:$0xff]
        %v440 = vld [vmem:[#allocation3 + $0x8] sm:$0xf]
        %v441 = vld [vmem:[#allocation3 + $0xc] sm:$0xff]
        %v442 = vld [vmem:[#allocation3 + $0x14] sm:$0xf]
        %v443 = vld [vmem:[#allocation3 + $0x18] sm:$0xff]
        %v444 = vld [vmem:[#allocation3 + $0x20] sm:$0xf]
        %v445 = vld [vmem:[#allocation3 + $0x24] sm:$0xff]
        %v446 = vld [vmem:[#allocation3 + $0x2c] sm:$0xf]
        %v447 = vld [vmem:[#allocation3 + $0x30] sm:$0xff]
        %v448 = vld [vmem:[#allocation3 + $0x38] sm:$0xf]
        %v449 = vld [vmem:[#allocation3 + $0x3c] sm:$0xff]
        %v450 = vld [vmem:[#allocation3 + $0x44] sm:$0xf]
        %v451 = vld [vmem:[#allocation3 + $0x48] sm:$0xff]
        %v452 = vld [vmem:[#allocation3 + $0x50] sm:$0xf]
        %v453 = vld [vmem:[#allocation3 + $0x54] sm:$0xff]
        %v454 = vld [vmem:[#allocation3 + $0x5c] sm:$0xf]
        %v455 = vld [vmem:[#allocation3 + $0x60] sm:$0xff]
        %v456 = vld [vmem:[#allocation3 + $0x68] sm:$0xf]
        %v475 = vunpack.c.l.b16 %v439
        %v476 = vunpack.c.h.b16 %v439
        %v477 = vunpack.c.l.b16 %v440
        %v478 = vunpack.c.l.b16 %v441
        %v479 = vunpack.c.h.b16 %v441
        %v480 = vunpack.c.l.b16 %v442
        %v481 = vunpack.c.l.b16 %v443
        %v482 = vunpack.c.h.b16 %v443
        %v483 = vunpack.c.l.b16 %v444
        %v484 = vunpack.c.l.b16 %v445
        %v485 = vunpack.c.h.b16 %v445
        %v486 = vunpack.c.l.b16 %v446
        %v487 = vunpack.c.l.b16 %v447
        %v488 = vunpack.c.h.b16 %v447
        %v489 = vunpack.c.l.b16 %v448
        %v490 = vunpack.c.l.b16 %v449
        %v491 = vunpack.c.h.b16 %v449
        %v492 = vunpack.c.l.b16 %v450
        %v493 = vunpack.c.l.b16 %v451
        %v494 = vunpack.c.h.b16 %v451
        %v495 = vunpack.c.l.b16 %v452
        %v496 = vunpack.c.l.b16 %v453
        %v497 = vunpack.c.h.b16 %v453
        %v498 = vunpack.c.l.b16 %v454
        %v499 = vunpack.c.l.b16 %v455
        %v500 = vunpack.c.h.b16 %v455
        %v501 = vunpack.c.l.b16 %v456
        %v502 = vpack.c.b16 %v478, %v475
        %v503 = vpack.c.b16 %v479, %v476
        %v504 = vpack.c.b16 %v480, %v477
        %v505 = vpack.c.b16 %v484, %v481
        %v506 = vpack.c.b16 %v485, %v482
        %v507 = vpack.c.b16 %v486, %v483
        %v508 = vpack.c.b16 %v490, %v487
        %v509 = vpack.c.b16 %v491, %v488
        %v510 = vpack.c.b16 %v492, %v489
        %v511 = vpack.c.b16 %v496, %v493
        %v512 = vpack.c.b16 %v497, %v494
        %v513 = vpack.c.b16 %v498, %v495
        %v514 = vpack.c.b16 %v499, %v499
        %v515 = vpack.c.b16 %v500, %v500
        %v516 = vpack.c.b16 %v501, %v501
        %vm529 = vcmask 588800
        %v531 = vsel %vm529, %v438, 0
        %vm533 = vcmask 1043456
        %v535 = vsel %vm533, %v514, 0
        %v538 = vsel %vm533, %v515, 0
        %v541 = vsel %vm533, %v516, 0
        %543 = vmatprep.subr.bf16.mxu0 %v503
        %544 = vmatpush1.bf16.msra.mxu0 %v502
        %545 = vmatprep.subr.bf16.mxu0 %v506
        %546 = vmatpush1.bf16.msra.mxu0 %v505
        %547 = vmatprep.subr.bf16.mxu0 %v509
        %548 = vmatpush1.bf16.msra.mxu0 %v508
        %549 = vmatprep.subr.bf16.mxu0 %v512
        %550 = vmatpush1.bf16.msra.mxu0 %v511
        %551 = vmatprep.subr.bf16.mxu0 %v538
        %552 = vmatpush1.bf16.msra.mxu0 %v535
        %553 = vmatprep.subr.bf16.mxu0 0
        %554 = vmatpush1.bf16.msra.mxu0 0
        %555 = vmatprep.subr.bf16.mxu0 0
        %556 = vmatpush1.bf16.msra.mxu0 0
        %557 = vmatprep.subr.bf16.mxu0 0
        %558 = vmatpush1.bf16.msra.mxu0 0
        %559 = vmatprep.subr.bf16.mxu0 0
        %560 = vmatpush1.bf16.msra.mxu0 0
        %561 = vmatprep.subr.bf16.mxu0 0
        %562 = vmatpush1.bf16.msra.mxu0 0
        %563 = vmatprep.subr.bf16.mxu0 0
        %564 = vmatpush1.bf16.msra.mxu0 0
        %565 = vmatprep.subr.bf16.mxu0 0
        %566 = vmatpush1.bf16.msra.mxu0 0
        %567 = vmatprep.subr.bf16.mxu0 0
        %568 = vmatpush1.bf16.msra.mxu0 0
        %569 = vmatprep.subr.bf16.mxu0 0
        %570 = vmatpush1.bf16.msra.mxu0 0
        %571 = vmatprep.subr.bf16.mxu0 0
        %572 = vmatpush1.bf16.msra.mxu0 0
        %573 = vmatprep.subr.bf16.mxu0 0
        %574 = vmatpush1.bf16.msra.mxu0 0
        %575 = vmatprep.mubr.bf16.mxu0 0
        %576 = vmatmul.mubr.bf16.gmra.mrb[0].mxu0 %v531
        %v577 = vpop.f32.mrb[0].mxu0
        %v578 = vadd.f32 0.0, %v577
        %v579 = vpop.f32.mrb[0].mxu0
        %v580 = vadd.f32 0.0, %v579
        %v581 = vpop.f32.mrb[0].mxu0
        %v582 = vpop.f32.mrb[0].mxu0
        %583 = vdwg.mxu0
        %584 = vmatprep.subr.bf16.mxu0 0
        %585 = vmatpush1.bf16.msra.mxu0 %v504
        %586 = vmatprep.subr.bf16.mxu0 0
        %587 = vmatpush1.bf16.msra.mxu0 %v507
        %588 = vmatprep.subr.bf16.mxu0 0
        %589 = vmatpush1.bf16.msra.mxu0 %v510
        %590 = vmatprep.subr.bf16.mxu0 0
        %591 = vmatpush1.bf16.msra.mxu0 %v513
        %592 = vmatprep.subr.bf16.mxu0 0
        %593 = vmatpush1.bf16.msra.mxu0 %v541
        %594 = vmatprep.subr.bf16.mxu0 0
        %595 = vmatpush1.bf16.msra.mxu0 0
        %596 = vmatprep.subr.bf16.mxu0 0
        %597 = vmatpush1.bf16.msra.mxu0 0
        %598 = vmatprep.subr.bf16.mxu0 0
        %599 = vmatpush1.bf16.msra.mxu0 0
        %600 = vmatprep.subr.bf16.mxu0 0
        %601 = vmatpush1.bf16.msra.mxu0 0
        %602 = vmatprep.subr.bf16.mxu0 0
        %603 = vmatpush1.bf16.msra.mxu0 0
        %604 = vmatprep.subr.bf16.mxu0 0
        %605 = vmatpush1.bf16.msra.mxu0 0
        %606 = vmatprep.subr.bf16.mxu0 0
        %607 = vmatpush1.bf16.msra.mxu0 0
        %608 = vmatprep.subr.bf16.mxu0 0
        %609 = vmatpush1.bf16.msra.mxu0 0
        %610 = vmatprep.subr.bf16.mxu0 0
        %611 = vmatpush1.bf16.msra.mxu0 0
        %612 = vmatprep.subr.bf16.mxu0 0
        %613 = vmatpush1.bf16.msra.mxu0 0
        %614 = vmatprep.subr.bf16.mxu0 0
        %615 = vmatpush1.bf16.msra.mxu0 0
        %616 = vmatprep.mubr.bf16.mxu0 0
        %617 = vmatmul.mubr.bf16.gmra.mrb[0].mxu0 %v531
        %v618 = vpop.f32.mrb[0].mxu0
        %v619 = vadd.f32 0.0, %v618
        %v620 = vpop.f32.mrb[0].mxu0
        %v621 = vpop.f32.mrb[0].mxu0
        %v622 = vpop.f32.mrb[0].mxu0
        %623 = vdwg.mxu0
        %v624 = vadd.f32 %v435, %v578
        %v625 = vadd.f32 %v436, %v580
        %v626 = vadd.f32 %v437, %v619
        %627 = vst [vmem:[#allocation2] sm:$0xff] %v624
        %628 = vst [vmem:[#allocation2 + $0x8] sm:$0xff] %v625
        %vm629 = vcmask 523264
        %630 = vst.msk [vmem:[#allocation2 + $0x10] sm:$0xff] %vm629, %v626
        // Predicated region
        $region45: #{tpu_custom_call.1} parent=31 // pred_check
          %p631 = pneg %p282
        $region46: #{tpu_custom_call.1} parent=31 // pred_check_branch
          %633 = sbr.rel (%p631) target = $region48
        $region47: #{tpu_custom_call.1} parent=31 // pred_region
          %v634 = vld [vmem:[#allocation2] sm:$0xff]
          %v635 = vld [vmem:[#allocation2 + $0x8] sm:$0xff]
          %v636 = vld [vmem:[#allocation2 + $0x10] sm:$0xff]
          %v637 = vpack.c.bf16 %v634, %v634
          %v638 = vpack.c.bf16 %v635, %v635
          %v639 = vpack.c.bf16 %v636, %v636
          %v643 = vunpack.c.l.b16 %v637
          %v644 = vunpack.c.l.b16 %v638
          %v645 = vunpack.c.l.b16 %v639
          %v646 = vpack.c.b16 %v644, %v643
          %v647 = vpack.c.b16 %v645, %v645
          %650 = vst [vmem:[%s264] sm:$0xff] %v646
          %651 = vst.msk [vmem:[%s264 + $0x8] sm:$0xf] %vm293, %v647
          %v652 = vld [vmem:[%s2] sm:$0x7]
          %v654 = vlaneseq
          %v655 = vshrl.u32 %v654, 7
          %v656 = vsub.s32 0, %v655
          %v657 = vrot.slane %v652, %v656
          %v658 = vlaneseq
          %v659 = vshrl.u32 %v658, 7
          %v660 = vsub.s32 1, %v659
          %v661 = vrot.slane %v652, %v660
          %v662 = vlaneseq
          %v663 = vshrl.u32 %v662, 7
          %v664 = vsub.s32 2, %v663
          %v665 = vrot.slane %v652, %v664
          %v669 = vmul.f32 %v634, %v657
          %v670 = vmul.f32 %v635, %v661
          %v671 = vmul.f32 %v636, %v665
          %v672 = vadd.f32 %v669, %v670
          %v673 = vsel %vm629, %v671, 0.0
          %v674 = vadd.f32 %v672, %v673
          %675 = vadd.xlane.f32.xlu0 %v674
          %v676 = vpop.xlane.xlu0 %675
          %v677 = vmul.f32 %v676, 0.00390625
          %v678 = vsub.f32 %v634, %v677
          %v679 = vsub.f32 %v635, %v677
          %v680 = vsub.f32 %v636, %v677
          %v681 = vmul.f32 %v678, %v657
          %v682 = vmul.f32 %v679, %v661
          %v683 = vmul.f32 %v680, %v665
          %v684 = vmul.f32 %v681, %v681
          %v685 = vmul.f32 %v682, %v682
          %v686 = vmul.f32 %v683, %v683
          %v687 = vadd.f32 %v684, %v685
          %v688 = vsel %vm629, %v686, 0.0
          %v689 = vadd.f32 %v687, %v688
          %690 = vadd.xlane.f32.xlu0 %v689
          %v691 = vpop.xlane.xlu0 %690
          %vm692 = vcmask 7168
          %693 = vst.msk [vmem:[%s280] sm:$0xff] %vm692, %v676
          %vm694 = vcmask 15368
          %695 = vst.msk [vmem:[%s280] sm:$0xff] %vm694, %v691
        $region48: #{tpu_custom_call.1} parent=31 // pred_fallthru
          _
        %s696 = sand.u32 %s129, 1
        %s697 = scalar_lea.sflag [#allocation6], %s696
        %s698 = sand.u32 %s129, 1
        %s699 = smul.addr %s698, 12
        %s700 = scalar_lea.vmem [#allocation9], %s699
        %p701 = scmp.lt.s32.totalorder %s28, 1
        %s702 = scalar_select %p701, %s28, 1
        %p703 = scmp.lt.s32.totalorder %s29, 0
        %s704 = scalar_select %p703, %s29, 0
        %s705 = sadd.s32 %s704, %s702
        %s706 = smul.addr %s705, 8
        %s707 = scalar_lea.vmem %s4, %s706
        // Predicated region
        $region49: #{tpu_custom_call.1} parent=31 // pred_check
          %p708 = pneg %p139
        $region50: #{tpu_custom_call.1} parent=31 // pred_check_branch
          %710 = sbr.rel (%p708) target = $region52
        $region51: #{tpu_custom_call.1} parent=31 // pred_region
          %s712 = ssub.s32 192, 192
          %713 = vsyncadd %s697, %s712
          %s714 = smul.addr %s29, 3
          %s715 = smul.addr %s28, 3
          %s716 = sadd.s32 %s714, %s715
          %s717 = smul.addr %s716, 64
          %s718 = scalar_lea.hbm %s3, %s717
          %s720 = sshll.u32 %s700, 4
          %s721 = int_to_ptr.vmem [resolvable:$true] %s720
          %723 = dma.vmem_to_hbm [thread:$0]  %s721, 192, %s718, %s697
        $region52: #{tpu_custom_call.1} parent=31 // pred_fallthru
          _
        // Predicated region
        $region53: #{tpu_custom_call.1} parent=31 // pred_check
          %p724 = pneg %p167
        $region54: #{tpu_custom_call.1} parent=31 // pred_check_branch
          %726 = sbr.rel (%p724) target = $region56
        $region55: #{tpu_custom_call.1} parent=31 // pred_region
          _
        $region56: #{tpu_custom_call.1} parent=31 // pred_fallthru
          _
      $region32: #{tpu_custom_call.1} parent=5 // pred_fallthru
        _
      %p727 = scmp.le.s32.totalorder 2, %s18
      // Predicated region
      $region57: #{tpu_custom_call.1} parent=5 // pred_check
        %p728 = pneg %p727
      $region58: #{tpu_custom_call.1} parent=5 // pred_check_branch
        %730 = sbr.rel (%p728) target = $region60
      $region59: #{tpu_custom_call.1} parent=5 // pred_region
        %s731 = ssub.s32 %s18, 2
        // Predicated region
        $region61: #{tpu_custom_call.1} parent=59 // pred_check
          %p732 = pneg %p145
        $region62: #{tpu_custom_call.1} parent=59 // pred_check_branch
          %734 = sbr.rel (%p732) target = $region64
        $region63: #{tpu_custom_call.1} parent=59 // pred_region
          %s735 = sand.u32 %s130, 1
          %s736 = scalar_lea.sflag [#allocation6], %s735
          %s737 = sand.u32 %s130, 1
          %s738 = smul.addr %s737, 12
          %s739 = scalar_lea.vmem [#allocation9], %s738
          %740 = dma.done %s736, 192
        $region64: #{tpu_custom_call.1} parent=59 // pred_fallthru
          _
        // Predicated region
        $region65: #{tpu_custom_call.1} parent=59 // pred_check
          %p741 = pneg %p173
        $region66: #{tpu_custom_call.1} parent=59 // pred_check_branch
          %743 = sbr.rel (%p741) target = $region68
        $region67: #{tpu_custom_call.1} parent=59 // pred_region
          %p744 = scmp.lt.s32.totalorder %s31, 1
          %s745 = scalar_select %p744, %s31, 1
          %p746 = scmp.lt.s32.totalorder %s32, 0
          %s747 = scalar_select %p746, %s32, 0
          %s748 = sadd.s32 %s747, %s745
          %s749 = smul.addr %s748, 8
          %s750 = scalar_lea.vmem %s4, %s749
        $region68: #{tpu_custom_call.1} parent=59 // pred_fallthru
          _
      $region60: #{tpu_custom_call.1} parent=5 // pred_fallthru
        _
    $region6: #{tpu_custom_call.1} parent=1 // loop_footer
      %s22 = sadd.s32 1, %s18
    $region7: #{tpu_custom_call.1} parent=1 // loop_footer_branch
      %17 = sbr.rel target = $region3
    $region8: #{tpu_custom_call.1} parent=1 // loop_exit
      _
    %751 = vsyncpa [#allocation5], 1
    %s752 = scalar_lea.sflag [#allocation5], 1
    %753 = vsyncpa %s752, 1
    %754 = vsyncpa [#allocation8], 1
    %755 = vsyncpa [#allocation6], 1
    %s756 = scalar_lea.sflag [#allocation6], 1
    %757 = vsyncpa %s756, 1

</llo_original>
